<compile_context>
chip_gen: v7x
topology: tpu7x:2x2x1
jax: 0.10.0
libtpu: 0.0.40
codegen_flags: <defaults>
</compile_context>

<pallas_src>
import numpy as np
import jax
import jax.numpy as jnp
from jax.experimental import pallas as pl
from jax.experimental.pallas import tpu as pltpu

LANE = 128


# ------------------------------ fused Pallas kernel ------------------------------

def _fused_kernel(img_ref, vol_ref, dep_r_ref, dep_p_ref,
                  rgb_ref, pooled_ref, occ_ref, disp_r_ref, disp_p_ref):
    # ---- (1) RGB un-normalization: tiled over the "parallel" grid axis --------
    rgb_ref[...] = img_ref[...] * 0.5 + 0.5

    # ---- (2) avg_pool3d(kernel=2, stride=1), separable (3 adds) ---------------
    # The volume / depth blocks use constant index maps (resident across the
    # grid); their stores are idempotent, so recomputing them on every grid step
    # is race-free under "parallel" megacore sharding and collapses to a single
    # evaluation at the demo grid=(1,).
    # TODO(synk): at realistic volume sizes give the volume its own grid axis
    # (X-slabs with a 1-voxel halo) instead of recomputing per image tile, and
    # re-derive tile sizes / vmem_limit for v7x's 64 MiB VMEM (and phase the
    # three stores across grid steps on v5e's single vst slot).
    v = vol_ref[...]                                   # (X, Y, Z), Z on lanes
    t = v[:, :, :-1] + v[:, :, 1:]                     # pair along Z (lane axis)
    t = t[:, :-1, :] + t[:, 1:, :]                     # pair along Y (sublanes)
    pooled = (t[:-1] + t[1:]) * 0.125                  # pair along X; /8
    pooled_ref[...] = pooled
    # fused occupancy mask: +1 B/voxel writeback instead of an extra XLA
    # read + compare + write pass over the pooled volume.
    occ_ref[...] = jnp.where(pooled > 0.5, 1, 0).astype(jnp.uint8)

    # ---- (3) disparity visualization (per depth map, sublane/lane dense) ------
    def _disp_u8(d_ref, o_ref):
        disp = pl.reciprocal(d_ref[...], approx=True)  # EUP slot, not VALU divide
        dmin = jnp.min(jnp.min(disp, axis=1, keepdims=True), axis=0, keepdims=True)
        dmax = jnp.max(jnp.max(disp, axis=1, keepdims=True), axis=0, keepdims=True)
        inv_range = pl.reciprocal(jnp.maximum(dmax - dmin, 1e-12), approx=True)
        val = (disp - dmin) * (inv_range * 255.0)
        # TODO(synk): a direct f32->uint8 convert would drop one conversion pass;
        # kept via int32 for guaranteed Mosaic lowering across chip generations.
        o_ref[...] = jnp.clip(val, 0.0, 255.0).astype(jnp.int32).astype(jnp.uint8)

    _disp_u8(dep_r_ref, disp_r_ref)
    _disp_u8(dep_p_ref, disp_p_ref)


# ------------------------------ wrapper helpers ------------------------------

def _as_lane_rows(x):
    """Flatten to a lane-dense (rows, 128) view.  Free reshape when numel % 128 == 0."""
    flat = x.reshape(-1)
    n = flat.shape[0]
    pad = (-n) % LANE
    if pad:
        # TODO(synk): ragged tail — edge-pad so min/max are unaffected (demo sizes
        # never hit this branch; a masked in-kernel store would avoid the copy).
        flat = jnp.pad(flat, (0, pad), mode="edge")
    return flat.reshape(-1, LANE), n


def _from_lane_rows(x2d, n, shape):
    flat = x2d.reshape(-1)
    if flat.shape[0] != n:
        flat = flat[:n]
    return flat.reshape(shape)


def _pick_row_tile(rows, target=512):
    """Largest multiple-of-8 divisor of `rows` that is <= target; else the full rows."""
    if rows <= target:
        return rows
    for t in range(target - (target % 8), 0, -8):
        if rows % t == 0:
            return t
    return rows


def bts_pallas_compute(images_b0, sigmas, rendered_depth_hw, pseudo_depth_hw):
    """Fused Pallas compute for the numeric hot paths.

    images_b0:         (B, C, H, W) float32
    sigmas:            (X, Y, Z)    float32  (Z on the lane axis)
    rendered_depth_hw: (H, W)       float32
    pseudo_depth_hw:   (H, W)       float32

    Returns (images_denorm (B,C,H,W) f32,
             alphas_mean   (X-1,Y-1,Z-1) f32,
             is_occupied_u8(X-1,Y-1,Z-1) u8,
             disp_rendered (H,W) u8, disp_pseudo (H,W) u8).
    """
    B, C, H, W = images_b0.shape
    X, Y, Z = sigmas.shape

    img2d, img_n = _as_lane_rows(images_b0)
    dr2d, d_n = _as_lane_rows(rendered_depth_hw)
    dp2d, _ = _as_lane_rows(pseudo_depth_hw)
    rows = img2d.shape[0]
    drows = dr2d.shape[0]

    tile = _pick_row_tile(rows)
    grid = (rows // tile,)

    rgb2d, pooled, occ_u8, disp_r2d, disp_p2d = pl.pallas_call(
        _fused_kernel,
        out_shape=(
            jax.ShapeDtypeStruct((rows, LANE), jnp.float32),
            jax.ShapeDtypeStruct((X - 1, Y - 1, Z - 1), jnp.float32),
            jax.ShapeDtypeStruct((X - 1, Y - 1, Z - 1), jnp.uint8),
            jax.ShapeDtypeStruct((drows, LANE), jnp.uint8),
            jax.ShapeDtypeStruct((drows, LANE), jnp.uint8),
        ),
        grid=grid,
        in_specs=[
            pl.BlockSpec((tile, LANE), lambda i: (i, 0)),          # image tiles
            pl.BlockSpec((X, Y, Z), lambda i: (0, 0, 0)),          # sigma volume (resident)
            pl.BlockSpec((drows, LANE), lambda i: (0, 0)),         # rendered depth
            pl.BlockSpec((drows, LANE), lambda i: (0, 0)),         # pseudo depth
        ],
        out_specs=(
            pl.BlockSpec((tile, LANE), lambda i: (i, 0)),
            pl.BlockSpec((X - 1, Y - 1, Z - 1), lambda i: (0, 0, 0)),
            pl.BlockSpec((X - 1, Y - 1, Z - 1), lambda i: (0, 0, 0)),
            pl.BlockSpec((drows, LANE), lambda i: (0, 0)),
            pl.BlockSpec((drows, LANE), lambda i: (0, 0)),
        ),
        compiler_params=pltpu.CompilerParams(
            dimension_semantics=("parallel",),
            vmem_limit_bytes=32 * 1024 * 1024,   # above v5e's 16 MiB default; safe on v7x
        ),
    )(img2d, sigmas, dr2d, dp2d)

    rgb = _from_lane_rows(rgb2d, img_n, (B, C, H, W))
    disp_r = _from_lane_rows(disp_r2d, d_n, (H, W))
    disp_p = _from_lane_rows(disp_p2d, d_n, (H, W))
    return rgb, pooled, occ_u8, disp_r, disp_p


# ------------------------- deterministic "__init__" -------------------------

def make_constants(p_res_y=8):
    proj = jnp.array([[0.7849, 0.0, -0.0312, 0.0],
                      [0.0, 2.9391, 0.2701, 0.0],
                      [0.0, 0.0, 1.0, 0.0],
                      [0.0, 0.0, 0.0, 1.0]], dtype=jnp.float32).reshape(1, 4, 4)
    cam_incl_adjust = jnp.array([[1.0, 0.0, 0.0, 0.0],
                                 [0.0, 0.9961947, -0.0871557, 0.0],
                                 [0.0, 0.0871557, 0.9961947, 0.0],
                                 [0.0, 0.0, 0.0, 1.0]], dtype=jnp.float32).reshape(1, 4, 4)
    faces_t = jnp.array([[0, 1, 2, 3], [0, 3, 7, 4], [2, 6, 7, 3],
                         [1, 2, 6, 5], [0, 1, 5, 4], [4, 5, 6, 7]], dtype=jnp.int32)
    # TODO(synk): matplotlib 'magma' colormap unavailable; deterministic RGB ramp stand-in.
    y_steps = 1.0 - (jnp.linspace(0.0, 1.0 - 1.0 / p_res_y, p_res_y) + 1.0 / (2 * p_res_y))
    y_to_color = (jnp.stack([y_steps, y_steps * 0.5, 1.0 - y_steps], axis=-1) * 255.0
                  ).astype(jnp.uint8)
    return proj, cam_incl_adjust, faces_t, y_to_color


# --------------------------------- forward ----------------------------------

def bts_wrapper_forward(data, constants):
    proj, cam_incl_adjust, faces_t, y_to_color = constants

    # images = torch.stack(data['imgs'], dim=1)[:, :1]
    images = jnp.stack(data['imgs'], axis=1)[:, :1]             # (B, 1, C, H, W)
    B, V, C, H, W = images.shape

    # poses = eye(4); projs = proj[:, :, :3, :3]
    # NOTE: to_base_pose = inv(eye) = eye and eye @ poses = poses, so the original
    # torch.inverse + matmul is an identity and is dropped.
    poses = jnp.eye(4, dtype=jnp.float32).reshape(1, 1, 4, 4)
    projs = proj.reshape(1, 1, 4, 4)[:, :, :3, :3]

    # TODO(synk): renderer.net.encode / renderer.net.forward, ImageRaySampler +
    # NeRF render + distance_to_z, RID(resnet18) + DepthRefinement are external
    # neural networks; their sigma volume / depth maps are supplied as data.
    sigmas = data['sigmas']                                     # (X, Y, Z)
    rendered_depth = data['rendered_depth'][0, 0]               # (H, W)
    pseudo_depth = data['pseudo_depth'][0][0, 0]                # (H, W)

    # ---- single fused Pallas launch for all numeric hot paths ----
    rgb, alphas_mean, occ_u8, disp_rendered_u8, disp_pseudo_u8 = bts_pallas_compute(
        images[:, 0], sigmas, rendered_depth, pseudo_depth)

    # img = images[0, 0].permute(1, 2, 0) * 0.5 + 0.5
    rgb_save = jnp.transpose(rgb[0], (1, 2, 0))                 # (H, W, C)

    # is_occupied = alphas_mean.squeeze() > 0.5 (compare fused in-kernel)
    is_occupied = occ_u8.astype(jnp.bool_)

    # TODO(synk): build_voxels / PlyData export, cv2 applyColorMap + imwrite and
    # the draw_bev render_profile branch are host-side geometry / image I/O.

    out = dict(data)
    out.update({
        'rgb_save': rgb_save,
        'images_denorm': rgb,
        'poses': poses,
        'projs': projs,
        'alphas_mean': alphas_mean,
        'is_occupied': is_occupied,
        'disp_rendered_u8': disp_rendered_u8,
        'disp_pseudo_u8': disp_pseudo_u8,
        'y_to_color': y_to_color,
        'faces_t': faces_t,
        'cam_incl_adjust': cam_incl_adjust,
    })
    return out


# ----------------------------------- main ------------------------------------

if __name__ == "__main__":
    key = jax.random.PRNGKey(0)
    k1, k2, k3, k4 = jax.random.split(key, 4)

    B, C, H, W = 2, 3, 16, 16         # small NCHW images
    X, Y, Z = 16, 8, 128              # p_res_x, p_res_y, p_res_z (Z lane-dense)

    imgs = [jax.random.normal(k1, (B, C, H, W), jnp.float32)]
    pseudo_depth = [jax.random.uniform(k2, (B, 1, H, W), jnp.float32,
                                       minval=1.0, maxval=10.0)]
    sigmas = jax.random.uniform(k3, (X, Y, Z), jnp.float32)
    rendered_depth = jax.random.uniform(k4, (B, 1, H, W), jnp.float32,
                                        minval=1.0, maxval=20.0)

    data = {
        'imgs': imgs,
        'pseudo_depth': pseudo_depth,
        'sigmas': sigmas,
        'rendered_depth': rendered_depth,
    }

    constants = make_constants(p_res_y=Y)
    out = bts_wrapper_forward(data, constants)
    jax.block_until_ready((out['images_denorm'], out['alphas_mean'],
                           out['is_occupied'], out['disp_rendered_u8'],
                           out['disp_pseudo_u8']))

    # ---- light correctness checks against plain-numpy references ----
    ref_rgb = np.asarray(imgs[0]) * 0.5 + 0.5
    np.testing.assert_allclose(np.asarray(out['images_denorm']), ref_rgb, atol=1e-5)

    v = np.asarray(sigmas)
    ref_pool = (v[:-1, :-1, :-1] + v[1:, :-1, :-1] + v[:-1, 1:, :-1] + v[1:, 1:, :-1] +
                v[:-1, :-1, 1:] + v[1:, :-1, 1:] + v[:-1, 1:, 1:] + v[1:, 1:, 1:]) / 8.0
    np.testing.assert_allclose(np.asarray(out['alphas_mean']), ref_pool,
                               atol=1e-4, rtol=1e-5)
    # occupancy mask is computed in-kernel from the same pooled values -> exact.
    np.testing.assert_array_equal(np.asarray(out['is_occupied']),
                                  np.asarray(out['alphas_mean']) > 0.5)

    def ref_disp_u8(d):
        disp = 1.0 / d
        n = (disp - disp.min()) / (disp.max() - disp.min()) * 255.0
        return np.clip(n, 0.0, 255.0).astype(np.uint8)

    # atol=3: approx (EUP) reciprocals + float->int truncation boundaries.
    np.testing.assert_allclose(
        np.asarray(out['disp_rendered_u8']).astype(np.int32),
        ref_disp_u8(np.asarray(rendered_depth)[0, 0]).astype(np.int32), atol=3)
    np.testing.assert_allclose(
        np.asarray(out['disp_pseudo_u8']).astype(np.int32),
        ref_disp_u8(np.asarray(pseudo_depth[0])[0, 0]).astype(np.int32), atol=3)

    print("KERNEL_OK")
</pallas_src>

<mosaic_0001>
module attributes {stable_mosaic.version = 11 : i64} {
  func.func @_fused_kernel(%arg0: i32, %arg1: memref<12x128xf32, #tpu.memory_space<vmem>>, %arg2: memref<16x8x128xf32, #tpu.memory_space<vmem>>, %arg3: memref<2x128xf32, #tpu.memory_space<vmem>>, %arg4: memref<2x128xf32, #tpu.memory_space<vmem>>, %arg5: memref<12x128xf32, #tpu.memory_space<vmem>>, %arg6: memref<15x7x127xf32, #tpu.memory_space<vmem>>, %arg7: memref<15x7x127xi8, #tpu.memory_space<vmem>>, %arg8: memref<2x128xi8, #tpu.memory_space<vmem>>, %arg9: memref<2x128xi8, #tpu.memory_space<vmem>>) attributes {dimension_semantics = [#tpu.dimension_semantics<parallel>], iteration_bounds = array<i64: 1>, scalar_prefetch = 0 : i64, scratch_operands = 0 : i64, tpu.core_type = #tpu.core_type<tc>, window_params = [{transform_indices = @transform_0, window_bounds = array<i64: 12, 128>}, {pipeline_mode = #tpu.pipeline_mode<synchronous>, transform_indices = @transform_1, window_bounds = array<i64: 16, 8, 128>}, {pipeline_mode = #tpu.pipeline_mode<synchronous>, transform_indices = @transform_2, window_bounds = array<i64: 2, 128>}, {pipeline_mode = #tpu.pipeline_mode<synchronous>, transform_indices = @transform_3, window_bounds = array<i64: 2, 128>}, {transform_indices = @transform_4, window_bounds = array<i64: 12, 128>}, {pipeline_mode = #tpu.pipeline_mode<synchronous>, transform_indices = @transform_5, window_bounds = array<i64: 15, 7, 127>}, {pipeline_mode = #tpu.pipeline_mode<synchronous>, transform_indices = @transform_6, window_bounds = array<i64: 15, 7, 127>}, {pipeline_mode = #tpu.pipeline_mode<synchronous>, transform_indices = @transform_7, window_bounds = array<i64: 2, 128>}, {pipeline_mode = #tpu.pipeline_mode<synchronous>, transform_indices = @transform_8, window_bounds = array<i64: 2, 128>}]} {
    %c0 = arith.constant 0 : index
    %c0_0 = arith.constant 0 : index
    %0 = vector.load %arg1[%c0, %c0_0] : memref<12x128xf32, #tpu.memory_space<vmem>>, vector<12x128xf32>
    %cst = arith.constant 5.000000e-01 : f32
    %1 = vector.broadcast %cst : f32 to vector<12x128xf32>
    %2 = arith.mulf %0, %1 : vector<12x128xf32>
    %cst_1 = arith.constant 5.000000e-01 : f32
    %3 = vector.broadcast %cst_1 : f32 to vector<12x128xf32>
    %4 = arith.addf %2, %3 : vector<12x128xf32>
    %c0_2 = arith.constant 0 : index
    %c0_3 = arith.constant 0 : index
    %5 = vector.load %arg5[%c0_2, %c0_3] : memref<12x128xf32, #tpu.memory_space<vmem>>, vector<12x128xf32>
    tpu.vector_store %arg5[%c0_2, %c0_3], %4 {strides = array<i32>} : memref<12x128xf32, #tpu.memory_space<vmem>>, vector<12x128xf32>,
    %c0_4 = arith.constant 0 : index
    %c0_5 = arith.constant 0 : index
    %c0_6 = arith.constant 0 : index
    %6 = vector.load %arg2[%c0_4, %c0_5, %c0_6] : memref<16x8x128xf32, #tpu.memory_space<vmem>>, vector<16x8x128xf32>
    %7 = vector.extract_strided_slice %6 {offsets = [0, 0, 0], sizes = [16, 8, 127], strides = [1, 1, 1]} : vector<16x8x128xf32> to vector<16x8x127xf32>
    %8 = vector.extract_strided_slice %6 {offsets = [0, 0, 1], sizes = [16, 8, 127], strides = [1, 1, 1]} : vector<16x8x128xf32> to vector<16x8x127xf32>
    %9 = arith.addf %7, %8 : vector<16x8x127xf32>
    %10 = vector.extract_strided_slice %9 {offsets = [0, 0, 0], sizes = [16, 7, 127], strides = [1, 1, 1]} : vector<16x8x127xf32> to vector<16x7x127xf32>
    %11 = vector.extract_strided_slice %9 {offsets = [0, 1, 0], sizes = [16, 7, 127], strides = [1, 1, 1]} : vector<16x8x127xf32> to vector<16x7x127xf32>
    %12 = arith.addf %10, %11 : vector<16x7x127xf32>
    %13 = vector.extract_strided_slice %12 {offsets = [0, 0, 0], sizes = [15, 7, 127], strides = [1, 1, 1]} : vector<16x7x127xf32> to vector<15x7x127xf32>
    %14 = vector.extract_strided_slice %12 {offsets = [1, 0, 0], sizes = [15, 7, 127], strides = [1, 1, 1]} : vector<16x7x127xf32> to vector<15x7x127xf32>
    %15 = arith.addf %13, %14 : vector<15x7x127xf32>
    %cst_7 = arith.constant 1.250000e-01 : f32
    %16 = vector.broadcast %cst_7 : f32 to vector<15x7x127xf32>
    %17 = arith.mulf %15, %16 : vector<15x7x127xf32>
    %c0_8 = arith.constant 0 : index
    %c0_9 = arith.constant 0 : index
    %c0_10 = arith.constant 0 : index
    %18 = vector.load %arg6[%c0_8, %c0_9, %c0_10] : memref<15x7x127xf32, #tpu.memory_space<vmem>>, vector<15x7x127xf32>
    tpu.vector_store %arg6[%c0_8, %c0_9, %c0_10], %17 {strides = array<i32>} : memref<15x7x127xf32, #tpu.memory_space<vmem>>, vector<15x7x127xf32>,
    %cst_11 = arith.constant 5.000000e-01 : f32
    %19 = vector.broadcast %cst_11 : f32 to vector<15x7x127xf32>
    %20 = arith.cmpf ogt, %17, %19 : vector<15x7x127xf32>
    %c1_i32 = arith.constant 1 : i32
    %c0_i32 = arith.constant 0 : i32
    %21 = vector.broadcast %c1_i32 : i32 to vector<15x7x127xi32>
    %22 = vector.broadcast %c0_i32 : i32 to vector<15x7x127xi32>
    %23 = arith.select %20, %21, %22 : vector<15x7x127xi1>, vector<15x7x127xi32>
    %24 = arith.trunci %23 : vector<15x7x127xi32> to vector<15x7x127xi8>
    %c0_12 = arith.constant 0 : index
    %c0_13 = arith.constant 0 : index
    %c0_14 = arith.constant 0 : index
    %25 = vector.load %arg7[%c0_12, %c0_13, %c0_14] : memref<15x7x127xi8, #tpu.memory_space<vmem>>, vector<15x7x127xi8>
    tpu.vector_store %arg7[%c0_12, %c0_13, %c0_14], %24 {strides = array<i32>} : memref<15x7x127xi8, #tpu.memory_space<vmem>>, vector<15x7x127xi8>,
    %c0_15 = arith.constant 0 : index
    %c0_16 = arith.constant 0 : index
    %26 = vector.load %arg3[%c0_15, %c0_16] : memref<2x128xf32, #tpu.memory_space<vmem>>, vector<2x128xf32>
    %27 = tpu.reciprocal %26 {approx = true} : vector<2x128xf32> -> vector<2x128xf32>
    %cst_17 = arith.constant dense<0x7F800000> : vector<2xf32>
    %28 = vector.multi_reduction <minimumf>, %27, %cst_17 [1] : vector<2x128xf32> to vector<2xf32>
    %29 = vector.shape_cast %28 : vector<2xf32> to vector<2x1xf32>
    %cst_18 = arith.constant dense<0x7F800000> : vector<1xf32>
    %30 = vector.multi_reduction <minimumf>, %29, %cst_18 [0] : vector<2x1xf32> to vector<1xf32>
    %31 = vector.shape_cast %30 : vector<1xf32> to vector<1x1xf32>
    %cst_19 = arith.constant dense<0xFF800000> : vector<2xf32>
    %32 = vector.multi_reduction <maximumf>, %27, %cst_19 [1] : vector<2x128xf32> to vector<2xf32>
    %33 = vector.shape_cast %32 : vector<2xf32> to vector<2x1xf32>
    %cst_20 = arith.constant dense<0xFF800000> : vector<1xf32>
    %34 = vector.multi_reduction <maximumf>, %33, %cst_20 [0] : vector<2x1xf32> to vector<1xf32>
    %35 = vector.shape_cast %34 : vector<1xf32> to vector<1x1xf32>
    %36 = arith.subf %35, %31 : vector<1x1xf32>
    %cst_21 = arith.constant 9.99999996E-13 : f32
    %37 = vector.broadcast %cst_21 : f32 to vector<1x1xf32>
    %38 = arith.maximumf %36, %37 : vector<1x1xf32>
    %39 = tpu.reciprocal %38 {approx = true} : vector<1x1xf32> -> vector<1x1xf32>
    %40 = vector.broadcast %31 : vector<1x1xf32> to vector<2x128xf32>
    %41 = arith.subf %27, %40 : vector<2x128xf32>
    %cst_22 = arith.constant 2.550000e+02 : f32
    %42 = vector.broadcast %cst_22 : f32 to vector<1x1xf32>
    %43 = arith.mulf %39, %42 : vector<1x1xf32>
    %44 = vector.broadcast %43 : vector<1x1xf32> to vector<2x128xf32>
    %45 = arith.mulf %41, %44 : vector<2x128xf32>
    %cst_23 = arith.constant 0.000000e+00 : f32
    %cst_24 = arith.constant 2.550000e+02 : f32
    %46 = vector.broadcast %cst_23 : f32 to vector<2x128xf32>
    %47 = arith.maximumf %46, %45 : vector<2x128xf32>
    %48 = vector.broadcast %cst_24 : f32 to vector<2x128xf32>
    %49 = arith.minimumf %48, %47 : vector<2x128xf32>
    %50 = arith.fptosi %49 : vector<2x128xf32> to vector<2x128xi32>
    %51 = arith.trunci %50 : vector<2x128xi32> to vector<2x128xi8>
    %c0_25 = arith.constant 0 : index
    %c0_26 = arith.constant 0 : index
    %52 = vector.load %arg8[%c0_25, %c0_26] : memref<2x128xi8, #tpu.memory_space<vmem>>, vector<2x128xi8>
    tpu.vector_store %arg8[%c0_25, %c0_26], %51 {strides = array<i32>} : memref<2x128xi8, #tpu.memory_space<vmem>>, vector<2x128xi8>,
    %c0_27 = arith.constant 0 : index
    %c0_28 = arith.constant 0 : index
    %53 = vector.load %arg4[%c0_27, %c0_28] : memref<2x128xf32, #tpu.memory_space<vmem>>, vector<2x128xf32>
    %54 = tpu.reciprocal %53 {approx = true} : vector<2x128xf32> -> vector<2x128xf32>
    %cst_29 = arith.constant dense<0x7F800000> : vector<2xf32>
    %55 = vector.multi_reduction <minimumf>, %54, %cst_29 [1] : vector<2x128xf32> to vector<2xf32>
    %56 = vector.shape_cast %55 : vector<2xf32> to vector<2x1xf32>
    %cst_30 = arith.constant dense<0x7F800000> : vector<1xf32>
    %57 = vector.multi_reduction <minimumf>, %56, %cst_30 [0] : vector<2x1xf32> to vector<1xf32>
    %58 = vector.shape_cast %57 : vector<1xf32> to vector<1x1xf32>
    %cst_31 = arith.constant dense<0xFF800000> : vector<2xf32>
    %59 = vector.multi_reduction <maximumf>, %54, %cst_31 [1] : vector<2x128xf32> to vector<2xf32>
    %60 = vector.shape_cast %59 : vector<2xf32> to vector<2x1xf32>
    %cst_32 = arith.constant dense<0xFF800000> : vector<1xf32>
    %61 = vector.multi_reduction <maximumf>, %60, %cst_32 [0] : vector<2x1xf32> to vector<1xf32>
    %62 = vector.shape_cast %61 : vector<1xf32> to vector<1x1xf32>
    %63 = arith.subf %62, %58 : vector<1x1xf32>
    %cst_33 = arith.constant 9.99999996E-13 : f32
    %64 = vector.broadcast %cst_33 : f32 to vector<1x1xf32>
    %65 = arith.maximumf %63, %64 : vector<1x1xf32>
    %66 = tpu.reciprocal %65 {approx = true} : vector<1x1xf32> -> vector<1x1xf32>
    %67 = vector.broadcast %58 : vector<1x1xf32> to vector<2x128xf32>
    %68 = arith.subf %54, %67 : vector<2x128xf32>
    %cst_34 = arith.constant 2.550000e+02 : f32
    %69 = vector.broadcast %cst_34 : f32 to vector<1x1xf32>
    %70 = arith.mulf %66, %69 : vector<1x1xf32>
    %71 = vector.broadcast %70 : vector<1x1xf32> to vector<2x128xf32>
    %72 = arith.mulf %68, %71 : vector<2x128xf32>
    %cst_35 = arith.constant 0.000000e+00 : f32
    %cst_36 = arith.constant 2.550000e+02 : f32
    %73 = vector.broadcast %cst_35 : f32 to vector<2x128xf32>
    %74 = arith.maximumf %73, %72 : vector<2x128xf32>
    %75 = vector.broadcast %cst_36 : f32 to vector<2x128xf32>
    %76 = arith.minimumf %75, %74 : vector<2x128xf32>
    %77 = arith.fptosi %76 : vector<2x128xf32> to vector<2x128xi32>
    %78 = arith.trunci %77 : vector<2x128xi32> to vector<2x128xi8>
    %c0_37 = arith.constant 0 : index
    %c0_38 = arith.constant 0 : index
    %79 = vector.load %arg9[%c0_37, %c0_38] : memref<2x128xi8, #tpu.memory_space<vmem>>, vector<2x128xi8>
    tpu.vector_store %arg9[%c0_37, %c0_38], %78 {strides = array<i32>} : memref<2x128xi8, #tpu.memory_space<vmem>>, vector<2x128xi8>,
    return
  }
  func.func @transform_0(%arg0: i32) -> (i32, i32) {
    %c0_i32 = arith.constant 0 : i32
    %c0_i32_0 = arith.constant 0 : i32
    return %arg0, %c0_i32 : i32, i32
  }
  func.func @transform_1(%arg0: i32) -> (i32, i32, i32) {
    %c0_i32 = arith.constant 0 : i32
    %c0_i32_0 = arith.constant 0 : i32
    %c0_i32_1 = arith.constant 0 : i32
    %c0_i32_2 = arith.constant 0 : i32
    return %c0_i32, %c0_i32_0, %c0_i32_1 : i32, i32, i32
  }
  func.func @transform_2(%arg0: i32) -> (i32, i32) {
    %c0_i32 = arith.constant 0 : i32
    %c0_i32_0 = arith.constant 0 : i32
    %c0_i32_1 = arith.constant 0 : i32
    return %c0_i32, %c0_i32_0 : i32, i32
  }
  func.func @transform_3(%arg0: i32) -> (i32, i32) {
    %c0_i32 = arith.constant 0 : i32
    %c0_i32_0 = arith.constant 0 : i32
    %c0_i32_1 = arith.constant 0 : i32
    return %c0_i32, %c0_i32_0 : i32, i32
  }
  func.func @transform_4(%arg0: i32) -> (i32, i32) {
    %c0_i32 = arith.constant 0 : i32
    %c0_i32_0 = arith.constant 0 : i32
    return %arg0, %c0_i32 : i32, i32
  }
  func.func @transform_5(%arg0: i32) -> (i32, i32, i32) {
    %c0_i32 = arith.constant 0 : i32
    %c0_i32_0 = arith.constant 0 : i32
    %c0_i32_1 = arith.constant 0 : i32
    %c0_i32_2 = arith.constant 0 : i32
    return %c0_i32, %c0_i32_0, %c0_i32_1 : i32, i32, i32
  }
  func.func @transform_6(%arg0: i32) -> (i32, i32, i32) {
    %c0_i32 = arith.constant 0 : i32
    %c0_i32_0 = arith.constant 0 : i32
    %c0_i32_1 = arith.constant 0 : i32
    %c0_i32_2 = arith.constant 0 : i32
    return %c0_i32, %c0_i32_0, %c0_i32_1 : i32, i32, i32
  }
  func.func @transform_7(%arg0: i32) -> (i32, i32) {
    %c0_i32 = arith.constant 0 : i32
    %c0_i32_0 = arith.constant 0 : i32
    %c0_i32_1 = arith.constant 0 : i32
    return %c0_i32, %c0_i32_0 : i32, i32
  }
  func.func @transform_8(%arg0: i32) -> (i32, i32) {
    %c0_i32 = arith.constant 0 : i32
    %c0_i32_0 = arith.constant 0 : i32
    %c0_i32_1 = arith.constant 0 : i32
    return %c0_i32, %c0_i32_0 : i32, i32
  }
}

</mosaic_0001>

<llo_original>
// kernel: tpu_custom_call.1
$region0: #{tpu_custom_call.1}
  #allocation0 [shape = 'u32[]', space=smem, size = 0x4, offset = 0x4, fixed_abs, tag = 'smem constant byte address 0x4 - core index']
  #allocation1 [shape = 'u32[144,128]{1,0:T(1,128)}', space=vmem, size = 0x12000, scoped, tag = 'internal scratch']
  %s0 = inlined_call_operand.hbm [shape: f32[12,128], index: 0, kind: input, shape index: {}]
  %s1 = inlined_call_operand.hbm [shape: f32[16,8,128], index: 1, kind: input, shape index: {}]
  %s2 = inlined_call_operand.vmem [shape: f32[2,128], index: 2, kind: input, shape index: {}]
  %s3 = inlined_call_operand.vmem [shape: f32[2,128], index: 3, kind: input, shape index: {}]
  %s4 = inlined_call_operand.hbm [shape: f32[12,128], index: 4, kind: output, shape index: {0}]
  %s5 = inlined_call_operand.vmem [shape: f32[15,7,127], index: 5, kind: output, shape index: {1}]
  %s6 = inlined_call_operand.vmem [shape: u8[15,7,127], index: 6, kind: output, shape index: {2}]
  %s7 = inlined_call_operand.hbm [shape: u8[2,128], index: 7, kind: output, shape index: {3}]
  %s8 = inlined_call_operand.hbm [shape: u8[2,128], index: 8, kind: output, shape index: {4}]
  %9 = xla_tuple %s4, %s5, %s6, %s7, %s8
  %s10 = sld [smem:[#allocation0]]
  $region66: #{tpu_custom_call.1} parent=0
    _
  %s12 = ssub.s32 1, %s10
  %s13 = scalar_select 0, %s12, %s10
  $region1: #{tpu_custom_call.1} parent=0
    #allocation2 [shape = 'u8[8192]{0}', space=vmem, size = 0x2000, scoped, tag = 'input window, operand 0, single buffered']
    #allocation3 [shape = 's32[1]{0}', space=sflag, size = 0x4, scoped, tag = 'scoped memory for tpu_custom_call.1']
    #allocation4 [shape = 's32[1]{0}', space=sflag, size = 0x4, scoped, tag = 'scoped memory for tpu_custom_call.1']
    #allocation5 [shape = 'u8[65536]{0}', space=vmem, size = 0x10000, scoped, tag = 'input window, operand 1, single buffered']
    #allocation6 [shape = 's32[1]{0}', space=sflag, size = 0x4, scoped, tag = 'scoped memory for tpu_custom_call.1']
    #allocation7 [shape = 'u8[8192]{0}', space=vmem, size = 0x2000, scoped, tag = 'output window, operand 0, single buffered']
    #allocation8 [shape = 'u8[512]{0}', space=vmem, size = 0x400, scoped, tag = 'output window, operand 3, single buffered']
    #allocation9 [shape = 's32[1]{0}', space=sflag, size = 0x4, scoped, tag = 'scoped memory for tpu_custom_call.1']
    #allocation10 [shape = 'u8[512]{0}', space=vmem, size = 0x400, scoped, tag = 'output window, operand 4, single buffered']
    %14 = vsyncpa [#allocation3], 0
    %15 = vsyncpa [#allocation6], 0
    %16 = vsyncpa [#allocation4], 0
    %17 = vsyncpa [#allocation9], 0
    // Predicated region
    $region2: #{tpu_custom_call.1} parent=1 // pred_check
      _
    $region3: #{tpu_custom_call.1} parent=1 // pred_check_branch
      %19 = sbr.rel (0) target = $region5
    $region4: #{tpu_custom_call.1} parent=1 // pred_region
      %s21 = ssub.s32 256, 256
      %22 = vsyncadd [#allocation3], %s21
      %s23 = sshll.u32 [#allocation2], 4
      %s24 = int_to_ptr.vmem [resolvable:$true] %s23
      %29 = dma.hbm_to_vmem [thread:$0]  %s0, 256, %s24, [#allocation3], 128, 128, 8
    $region5: #{tpu_custom_call.1} parent=1 // pred_fallthru
      _
    // Predicated region
    $region6: #{tpu_custom_call.1} parent=1 // pred_check
      _
    $region7: #{tpu_custom_call.1} parent=1 // pred_check_branch
      %31 = sbr.rel (0) target = $region9
    $region8: #{tpu_custom_call.1} parent=1 // pred_region
      %s33 = ssub.s32 2048, 2048
      %34 = vsyncadd [#allocation6], %s33
      %s35 = sshll.u32 [#allocation5], 4
      %s36 = int_to_ptr.vmem [resolvable:$true] %s35
      %41 = dma.hbm_to_vmem [thread:$0]  %s1, 2048, %s36, [#allocation6], 128, 128, 8
    $region9: #{tpu_custom_call.1} parent=1 // pred_fallthru
      _
    // Predicated region
    $region10: #{tpu_custom_call.1} parent=1 // pred_check
      _
    $region11: #{tpu_custom_call.1} parent=1 // pred_check_branch
      %43 = sbr.rel (0) target = $region13
    $region12: #{tpu_custom_call.1} parent=1 // pred_region
      _
    $region13: #{tpu_custom_call.1} parent=1 // pred_fallthru
      _
    // Predicated region
    $region14: #{tpu_custom_call.1} parent=1 // pred_check
      _
    $region15: #{tpu_custom_call.1} parent=1 // pred_check_branch
      %45 = sbr.rel (0) target = $region17
    $region16: #{tpu_custom_call.1} parent=1 // pred_region
      _
    $region17: #{tpu_custom_call.1} parent=1 // pred_fallthru
      _
    // Predicated region
    $region18: #{tpu_custom_call.1} parent=1 // pred_check
      _
    $region19: #{tpu_custom_call.1} parent=1 // pred_check_branch
      %47 = sbr.rel (0) target = $region21
    $region20: #{tpu_custom_call.1} parent=1 // pred_region
      %48 = dma.done [#allocation3], 256
    $region21: #{tpu_custom_call.1} parent=1 // pred_fallthru
      _
    // Predicated region
    $region22: #{tpu_custom_call.1} parent=1 // pred_check
      _
    $region23: #{tpu_custom_call.1} parent=1 // pred_check_branch
      %50 = sbr.rel (0) target = $region25
    $region24: #{tpu_custom_call.1} parent=1 // pred_region
      %51 = dma.done [#allocation6], 2048
    $region25: #{tpu_custom_call.1} parent=1 // pred_fallthru
      _
    %v52 = vld [vmem:[#allocation2] sm:$0xff]
    %v53 = vld [vmem:[#allocation2 + $0x8] sm:$0xf]
    %v54 = vmul.f32 %v52, 0.5
    %v55 = vmul.f32 %v53, 0.5
    %v56 = vadd.f32 %v54, 0.5
    %v57 = vadd.f32 %v55, 0.5
    %58 = vst [vmem:[#allocation7] sm:$0xff] %v56
    %59 = vst [vmem:[#allocation7 + $0x8] sm:$0xf] %v57
    %v60 = vld [vmem:[#allocation5] sm:$0xff]
    %v61 = vld [vmem:[#allocation5 + $0x8] sm:$0xff]
    %v62 = vld [vmem:[#allocation5 + $0x10] sm:$0xff]
    %v63 = vld [vmem:[#allocation5 + $0x18] sm:$0xff]
    %v64 = vld [vmem:[#allocation5 + $0x20] sm:$0xff]
    %v65 = vld [vmem:[#allocation5 + $0x28] sm:$0xff]
    %v66 = vld [vmem:[#allocation5 + $0x30] sm:$0xff]
    %v67 = vld [vmem:[#allocation5 + $0x38] sm:$0xff]
    %v68 = vld [vmem:[#allocation5 + $0x40] sm:$0xff]
    %v69 = vld [vmem:[#allocation5 + $0x48] sm:$0xff]
    %v70 = vld [vmem:[#allocation5 + $0x50] sm:$0xff]
    %v71 = vld [vmem:[#allocation5 + $0x58] sm:$0xff]
    %v72 = vld [vmem:[#allocation5 + $0x60] sm:$0xff]
    %v73 = vld [vmem:[#allocation5 + $0x68] sm:$0xff]
    %v74 = vld [vmem:[#allocation5 + $0x70] sm:$0xff]
    %v75 = vld [vmem:[#allocation5 + $0x78] sm:$0xff]
    %92 = vrot.lane.b32.xlu0 %v60, 127
    %v93 = vpop.permute.xlu0 %92
    %94 = vrot.lane.b32.xlu0 %v61, 127
    %v95 = vpop.permute.xlu0 %94
    %96 = vrot.lane.b32.xlu0 %v62, 127
    %v97 = vpop.permute.xlu0 %96
    %98 = vrot.lane.b32.xlu0 %v63, 127
    %v99 = vpop.permute.xlu0 %98
    %100 = vrot.lane.b32.xlu0 %v64, 127
    %v101 = vpop.permute.xlu0 %100
    %102 = vrot.lane.b32.xlu0 %v65, 127
    %v103 = vpop.permute.xlu0 %102
    %104 = vrot.lane.b32.xlu0 %v66, 127
    %v105 = vpop.permute.xlu0 %104
    %106 = vrot.lane.b32.xlu0 %v67, 127
    %v107 = vpop.permute.xlu0 %106
    %108 = vrot.lane.b32.xlu0 %v68, 127
    %v109 = vpop.permute.xlu0 %108
    %110 = vrot.lane.b32.xlu0 %v69, 127
    %v111 = vpop.permute.xlu0 %110
    %112 = vrot.lane.b32.xlu0 %v70, 127
    %v113 = vpop.permute.xlu0 %112
    %114 = vrot.lane.b32.xlu0 %v71, 127
    %v115 = vpop.permute.xlu0 %114
    %116 = vrot.lane.b32.xlu0 %v72, 127
    %v117 = vpop.permute.xlu0 %116
    %118 = vrot.lane.b32.xlu0 %v73, 127
    %v119 = vpop.permute.xlu0 %118
    %120 = vrot.lane.b32.xlu0 %v74, 127
    %v121 = vpop.permute.xlu0 %120
    %122 = vrot.lane.b32.xlu0 %v75, 127
    %v123 = vpop.permute.xlu0 %122
    %v140 = vadd.f32 %v60, %v93
    %v141 = vadd.f32 %v61, %v95
    %v142 = vadd.f32 %v62, %v97
    %v143 = vadd.f32 %v63, %v99
    %v144 = vadd.f32 %v64, %v101
    %v145 = vadd.f32 %v65, %v103
    %v146 = vadd.f32 %v66, %v105
    %v147 = vadd.f32 %v67, %v107
    %v148 = vadd.f32 %v68, %v109
    %v149 = vadd.f32 %v69, %v111
    %v150 = vadd.f32 %v70, %v113
    %v151 = vadd.f32 %v71, %v115
    %v152 = vadd.f32 %v72, %v117
    %v153 = vadd.f32 %v73, %v119
    %v154 = vadd.f32 %v74, %v121
    %v155 = vadd.f32 %v75, %v123
    %v172 = vrot.slane %v140, 1
    %v173 = vrot.slane %v141, 1
    %v174 = vrot.slane %v142, 1
    %v175 = vrot.slane %v143, 1
    %v176 = vrot.slane %v144, 1
    %v177 = vrot.slane %v145, 1
    %v178 = vrot.slane %v146, 1
    %v179 = vrot.slane %v147, 1
    %v180 = vrot.slane %v148, 1
    %v181 = vrot.slane %v149, 1
    %v182 = vrot.slane %v150, 1
    %v183 = vrot.slane %v151, 1
    %v184 = vrot.slane %v152, 1
    %v185 = vrot.slane %v153, 1
    %v186 = vrot.slane %v154, 1
    %v187 = vrot.slane %v155, 1
    %v204 = vadd.f32 %v140, %v172
    %v205 = vadd.f32 %v141, %v173
    %v206 = vadd.f32 %v142, %v174
    %v207 = vadd.f32 %v143, %v175
    %v208 = vadd.f32 %v144, %v176
    %v209 = vadd.f32 %v145, %v177
    %v210 = vadd.f32 %v146, %v178
    %v211 = vadd.f32 %v147, %v179
    %v212 = vadd.f32 %v148, %v180
    %v213 = vadd.f32 %v149, %v181
    %v214 = vadd.f32 %v150, %v182
    %v215 = vadd.f32 %v151, %v183
    %v216 = vadd.f32 %v152, %v184
    %v217 = vadd.f32 %v153, %v185
    %v218 = vadd.f32 %v154, %v186
    %v219 = vadd.f32 %v155, %v187
    %v220 = vadd.f32 %v204, %v205
    %v221 = vadd.f32 %v205, %v206
    %v222 = vadd.f32 %v206, %v207
    %v223 = vadd.f32 %v207, %v208
    %v224 = vadd.f32 %v208, %v209
    %v225 = vadd.f32 %v209, %v210
    %v226 = vadd.f32 %v210, %v211
    %v227 = vadd.f32 %v211, %v212
    %v228 = vadd.f32 %v212, %v213
    %v229 = vadd.f32 %v213, %v214
    %v230 = vadd.f32 %v214, %v215
    %v231 = vadd.f32 %v215, %v216
    %v232 = vadd.f32 %v216, %v217
    %v233 = vadd.f32 %v217, %v218
    %v234 = vadd.f32 %v218, %v219
    %v235 = vmul.f32 %v220, 0.125
    %v236 = vmul.f32 %v221, 0.125
    %v237 = vmul.f32 %v222, 0.125
    %v238 = vmul.f32 %v223, 0.125
    %v239 = vmul.f32 %v224, 0.125
    %v240 = vmul.f32 %v225, 0.125
    %v241 = vmul.f32 %v226, 0.125
    %v242 = vmul.f32 %v227, 0.125
    %v243 = vmul.f32 %v228, 0.125
    %v244 = vmul.f32 %v229, 0.125
    %v245 = vmul.f32 %v230, 0.125
    %v246 = vmul.f32 %v231, 0.125
    %v247 = vmul.f32 %v232, 0.125
    %v248 = vmul.f32 %v233, 0.125
    %v249 = vmul.f32 %v234, 0.125
    %vm250 = vcmask 1038336
    %251 = vst.msk [vmem:[%s5] sm:$0x7f] %vm250, %v235
    %252 = vst.msk [vmem:[%s5 + $0x8] sm:$0x7f] %vm250, %v236
    %253 = vst.msk [vmem:[%s5 + $0x10] sm:$0x7f] %vm250, %v237
    %254 = vst.msk [vmem:[%s5 + $0x18] sm:$0x7f] %vm250, %v238
    %255 = vst.msk [vmem:[%s5 + $0x20] sm:$0x7f] %vm250, %v239
    %256 = vst.msk [vmem:[%s5 + $0x28] sm:$0x7f] %vm250, %v240
    %257 = vst.msk [vmem:[%s5 + $0x30] sm:$0x7f] %vm250, %v241
    %258 = vst.msk [vmem:[%s5 + $0x38] sm:$0x7f] %vm250, %v242
    %259 = vst.msk [vmem:[%s5 + $0x40] sm:$0x7f] %vm250, %v243
    %260 = vst.msk [vmem:[%s5 + $0x48] sm:$0x7f] %vm250, %v244
    %261 = vst.msk [vmem:[%s5 + $0x50] sm:$0x7f] %vm250, %v245
    %262 = vst.msk [vmem:[%s5 + $0x58] sm:$0x7f] %vm250, %v246
    %263 = vst.msk [vmem:[%s5 + $0x60] sm:$0x7f] %vm250, %v247
    %264 = vst.msk [vmem:[%s5 + $0x68] sm:$0x7f] %vm250, %v248
    %265 = vst.msk [vmem:[%s5 + $0x70] sm:$0x7f] %vm250, %v249
    %vm266 = vcmp.gt.f32.partialorder %v235, 0.5
    %vm267 = vcmp.gt.f32.partialorder %v236, 0.5
    %vm268 = vcmp.gt.f32.partialorder %v237, 0.5
    %vm269 = vcmp.gt.f32.partialorder %v238, 0.5
    %vm270 = vcmp.gt.f32.partialorder %v239, 0.5
    %vm271 = vcmp.gt.f32.partialorder %v240, 0.5
    %vm272 = vcmp.gt.f32.partialorder %v241, 0.5
    %vm273 = vcmp.gt.f32.partialorder %v242, 0.5
    %vm274 = vcmp.gt.f32.partialorder %v243, 0.5
    %vm275 = vcmp.gt.f32.partialorder %v244, 0.5
    %vm276 = vcmp.gt.f32.partialorder %v245, 0.5
    %vm277 = vcmp.gt.f32.partialorder %v246, 0.5
    %vm278 = vcmp.gt.f32.partialorder %v247, 0.5
    %vm279 = vcmp.gt.f32.partialorder %v248, 0.5
    %vm280 = vcmp.gt.f32.partialorder %v249, 0.5
    %v281 = vsel %vm266, 1, 0
    %v282 = vsel %vm267, 1, 0
    %v283 = vsel %vm268, 1, 0
    %v284 = vsel %vm269, 1, 0
    %v285 = vsel %vm270, 1, 0
    %v286 = vsel %vm271, 1, 0
    %v287 = vsel %vm272, 1, 0
    %v288 = vsel %vm273, 1, 0
    %v289 = vsel %vm274, 1, 0
    %v290 = vsel %vm275, 1, 0
    %v291 = vsel %vm276, 1, 0
    %v292 = vsel %vm277, 1, 0
    %v293 = vsel %vm278, 1, 0
    %v294 = vsel %vm279, 1, 0
    %v295 = vsel %vm280, 1, 0
    %v296 = vpack.c.b16 %v281, %v281
    %v297 = vpack.c.b8 %v296, %v296
    %v298 = vpack.c.b16 %v282, %v282
    %v299 = vpack.c.b8 %v298, %v298
    %v300 = vpack.c.b16 %v283, %v283
    %v301 = vpack.c.b8 %v300, %v300
    %v302 = vpack.c.b16 %v284, %v284
    %v303 = vpack.c.b8 %v302, %v302
    %v304 = vpack.c.b16 %v285, %v285
    %v305 = vpack.c.b8 %v304, %v304
    %v306 = vpack.c.b16 %v286, %v286
    %v307 = vpack.c.b8 %v306, %v306
    %v308 = vpack.c.b16 %v287, %v287
    %v309 = vpack.c.b8 %v308, %v308
    %v310 = vpack.c.b16 %v288, %v288
    %v311 = vpack.c.b8 %v310, %v310
    %v312 = vpack.c.b16 %v289, %v289
    %v313 = vpack.c.b8 %v312, %v312
    %v314 = vpack.c.b16 %v290, %v290
    %v315 = vpack.c.b8 %v314, %v314
    %v316 = vpack.c.b16 %v291, %v291
    %v317 = vpack.c.b8 %v316, %v316
    %v318 = vpack.c.b16 %v292, %v292
    %v319 = vpack.c.b8 %v318, %v318
    %v320 = vpack.c.b16 %v293, %v293
    %v321 = vpack.c.b8 %v320, %v320
    %v322 = vpack.c.b16 %v294, %v294
    %v323 = vpack.c.b8 %v322, %v322
    %v324 = vpack.c.b16 %v295, %v295
    %v325 = vpack.c.b8 %v324, %v324
    %vm326 = vcmask 1033216
    %vm327 = vsmask.f32 1536
    %vm328 = vmand %vm326, %vm327
    %v329 = vld [vmem:[%s6] sm:$0x3]
    %v330 = vsel %vm328, %v297, %v329
    %331 = vst [vmem:[%s6] sm:$0x3] %v330
    %v332 = vld [vmem:[%s6 + $0x2] sm:$0x3]
    %v333 = vsel %vm328, %v299, %v332
    %334 = vst [vmem:[%s6 + $0x2] sm:$0x3] %v333
    %v335 = vld [vmem:[%s6 + $0x4] sm:$0x3]
    %v336 = vsel %vm328, %v301, %v335
    %337 = vst [vmem:[%s6 + $0x4] sm:$0x3] %v336
    %v338 = vld [vmem:[%s6 + $0x6] sm:$0x3]
    %v339 = vsel %vm328, %v303, %v338
    %340 = vst [vmem:[%s6 + $0x6] sm:$0x3] %v339
    %v341 = vld [vmem:[%s6 + $0x8] sm:$0x3]
    %v342 = vsel %vm328, %v305, %v341
    %343 = vst [vmem:[%s6 + $0x8] sm:$0x3] %v342
    %v344 = vld [vmem:[%s6 + $0xa] sm:$0x3]
    %v345 = vsel %vm328, %v307, %v344
    %346 = vst [vmem:[%s6 + $0xa] sm:$0x3] %v345
    %v347 = vld [vmem:[%s6 + $0xc] sm:$0x3]
    %v348 = vsel %vm328, %v309, %v347
    %349 = vst [vmem:[%s6 + $0xc] sm:$0x3] %v348
    %v350 = vld [vmem:[%s6 + $0xe] sm:$0x3]
    %v351 = vsel %vm328, %v311, %v350
    %352 = vst [vmem:[%s6 + $0xe] sm:$0x3] %v351
    %v353 = vld [vmem:[%s6 + $0x10] sm:$0x3]
    %v354 = vsel %vm328, %v313, %v353
    %355 = vst [vmem:[%s6 + $0x10] sm:$0x3] %v354
    %v356 = vld [vmem:[%s6 + $0x12] sm:$0x3]
    %v357 = vsel %vm328, %v315, %v356
    %358 = vst [vmem:[%s6 + $0x12] sm:$0x3] %v357
    %v359 = vld [vmem:[%s6 + $0x14] sm:$0x3]
    %v360 = vsel %vm328, %v317, %v359
    %361 = vst [vmem:[%s6 + $0x14] sm:$0x3] %v360
    %v362 = vld [vmem:[%s6 + $0x16] sm:$0x3]
    %v363 = vsel %vm328, %v319, %v362
    %364 = vst [vmem:[%s6 + $0x16] sm:$0x3] %v363
    %v365 = vld [vmem:[%s6 + $0x18] sm:$0x3]
    %v366 = vsel %vm328, %v321, %v365
    %367 = vst [vmem:[%s6 + $0x18] sm:$0x3] %v366
    %v368 = vld [vmem:[%s6 + $0x1a] sm:$0x3]
    %v369 = vsel %vm328, %v323, %v368
    %370 = vst [vmem:[%s6 + $0x1a] sm:$0x3] %v369
    %v371 = vld [vmem:[%s6 + $0x1c] sm:$0x3]
    %v372 = vsel %vm328, %v325, %v371
    %373 = vst [vmem:[%s6 + $0x1c] sm:$0x3] %v372
    %v374 = vld [vmem:[%s2] sm:$0x3]
    %v375 = vrcp.pop %v374
    %vm376 = vcmask 1041408
    %v377 = vsel %vm376, %v375, inf
    %378 = vmin.xlane.f32.xlu0 %v377
    %v379 = vpop.xlane.xlu0 %378
    %v380 = vsel %vm376, %v379, inf
    %v381 = vrot.slane %v380, 4
    %v382 = vmin.f32 %v380, %v381
    %v383 = vrot.slane %v382, 2
    %v384 = vmin.f32 %v382, %v383
    %v385 = vrot.slane %v384, 1
    %v386 = vmin.f32 %v384, %v385
    %v387 = vsel %vm376, %v375, -inf
    %388 = vmax.xlane.f32.xlu0 %v387
    %v389 = vpop.xlane.xlu0 %388
    %v390 = vsel %vm376, %v389, -inf
    %v391 = vrot.slane %v390, 4
    %v392 = vmax.f32 %v390, %v391
    %v393 = vrot.slane %v392, 2
    %v394 = vmax.f32 %v392, %v393
    %v395 = vrot.slane %v394, 1
    %v396 = vmax.f32 %v394, %v395
    %v397 = vsub.f32 %v396, %v386
    %v398 = vmax.f32 %v397, 1e-12
    %v399 = vrcp.pop %v398
    %v400 = vsub.f32 %v375, %v386
    %v401 = vmul.f32 %v399, 255.0
    %v402 = vmul.f32 %v400, %v401
    %v403 = vmax.f32 %v402, 0.0
    %v404 = vmin.f32 %v403, 255.0
    %v405 = vcvt.f32.s32.to.zero.pseudo %v404
    %v406 = vpack.c.b16 %v405, %v405
    %v407 = vpack.c.b8 %v406, %v406
    %vm408 = vcmask 1040384
    %vm409 = vsmask.f32 256
    %vm410 = vmand %vm408, %vm409
    %v411 = vld [vmem:[#allocation8] sm:$0x1]
    %v412 = vsel %vm410, %v407, %v411
    %413 = vst [vmem:[#allocation8] sm:$0x1] %v412
    %v414 = vld [vmem:[%s3] sm:$0x3]
    %v415 = vrcp.pop %v414
    %v416 = vsel %vm376, %v415, inf
    %417 = vmin.xlane.f32.xlu0 %v416
    %v418 = vpop.xlane.xlu0 %417
    %v419 = vsel %vm376, %v418, inf
    %v420 = vrot.slane %v419, 4
    %v421 = vmin.f32 %v419, %v420
    %v422 = vrot.slane %v421, 2
    %v423 = vmin.f32 %v421, %v422
    %v424 = vrot.slane %v423, 1
    %v425 = vmin.f32 %v423, %v424
    %v426 = vsel %vm376, %v415, -inf
    %427 = vmax.xlane.f32.xlu0 %v426
    %v428 = vpop.xlane.xlu0 %427
    %v429 = vsel %vm376, %v428, -inf
    %v430 = vrot.slane %v429, 4
    %v431 = vmax.f32 %v429, %v430
    %v432 = vrot.slane %v431, 2
    %v433 = vmax.f32 %v431, %v432
    %v434 = vrot.slane %v433, 1
    %v435 = vmax.f32 %v433, %v434
    %v436 = vsub.f32 %v435, %v425
    %v437 = vmax.f32 %v436, 1e-12
    %v438 = vrcp.pop %v437
    %v439 = vsub.f32 %v415, %v425
    %v440 = vmul.f32 %v438, 255.0
    %v441 = vmul.f32 %v439, %v440
    %v442 = vmax.f32 %v441, 0.0
    %v443 = vmin.f32 %v442, 255.0
    %v444 = vcvt.f32.s32.to.zero.pseudo %v443
    %v445 = vpack.c.b16 %v444, %v444
    %v446 = vpack.c.b8 %v445, %v445
    %v447 = vld [vmem:[#allocation10] sm:$0x1]
    %v448 = vsel %vm410, %v446, %v447
    %449 = vst [vmem:[#allocation10] sm:$0x1] %v448
    // Predicated region
    $region26: #{tpu_custom_call.1} parent=1 // pred_check
      _
    $region27: #{tpu_custom_call.1} parent=1 // pred_check_branch
      %451 = sbr.rel (0) target = $region29
    $region28: #{tpu_custom_call.1} parent=1 // pred_region
      %s453 = ssub.s32 256, 256
      %454 = vsyncadd [#allocation4], %s453
      %s455 = sshll.u32 [#allocation7], 4
      %s456 = int_to_ptr.vmem [resolvable:$true] %s455
      %461 = dma.vmem_to_hbm [thread:$0]  %s456, 256, %s4, [#allocation4], 128, 128, 8
    $region29: #{tpu_custom_call.1} parent=1 // pred_fallthru
      _
    // Predicated region
    $region30: #{tpu_custom_call.1} parent=1 // pred_check
      _
    $region31: #{tpu_custom_call.1} parent=1 // pred_check_branch
      %463 = sbr.rel (0) target = $region33
    $region32: #{tpu_custom_call.1} parent=1 // pred_region
      _
    $region33: #{tpu_custom_call.1} parent=1 // pred_fallthru
      _
    // Predicated region
    $region34: #{tpu_custom_call.1} parent=1 // pred_check
      _
    $region35: #{tpu_custom_call.1} parent=1 // pred_check_branch
      %465 = sbr.rel (0) target = $region37
    $region36: #{tpu_custom_call.1} parent=1 // pred_region
      _
    $region37: #{tpu_custom_call.1} parent=1 // pred_fallthru
      _
    // Predicated region
    $region38: #{tpu_custom_call.1} parent=1 // pred_check
      _
    $region39: #{tpu_custom_call.1} parent=1 // pred_check_branch
      %467 = sbr.rel (0) target = $region41
    $region40: #{tpu_custom_call.1} parent=1 // pred_region
      %s469 = ssub.s32 16, 16
      %470 = vsyncadd [#allocation9], %s469
      %s472 = sshll.u32 [#allocation8], 4
      %s473 = int_to_ptr.vmem [resolvable:$true] %s472
      %475 = dma.vmem_to_hbm [thread:$0]  %s473, 16, %s7, [#allocation9]
    $region41: #{tpu_custom_call.1} parent=1 // pred_fallthru
      _
    // Predicated region
    $region42: #{tpu_custom_call.1} parent=1 // pred_check
      _
    $region43: #{tpu_custom_call.1} parent=1 // pred_check_branch
      %477 = sbr.rel (0) target = $region45
    $region44: #{tpu_custom_call.1} parent=1 // pred_region
      %s479 = ssub.s32 16, 16
      %480 = vsyncadd [#allocation9], %s479
      %s482 = sshll.u32 [#allocation10], 4
      %s483 = int_to_ptr.vmem [resolvable:$true] %s482
      %485 = dma.vmem_to_hbm [thread:$0]  %s483, 16, %s8, [#allocation9]
    $region45: #{tpu_custom_call.1} parent=1 // pred_fallthru
      _
    // Predicated region
    $region46: #{tpu_custom_call.1} parent=1 // pred_check
      _
    $region47: #{tpu_custom_call.1} parent=1 // pred_check_branch
      %487 = sbr.rel (0) target = $region49
    $region48: #{tpu_custom_call.1} parent=1 // pred_region
      %488 = dma.done [#allocation4], 256
    $region49: #{tpu_custom_call.1} parent=1 // pred_fallthru
      _
    // Predicated region
    $region50: #{tpu_custom_call.1} parent=1 // pred_check
      _
    $region51: #{tpu_custom_call.1} parent=1 // pred_check_branch
      %490 = sbr.rel (0) target = $region53
    $region52: #{tpu_custom_call.1} parent=1 // pred_region
      _
    $region53: #{tpu_custom_call.1} parent=1 // pred_fallthru
      _
    // Predicated region
    $region54: #{tpu_custom_call.1} parent=1 // pred_check
      _
    $region55: #{tpu_custom_call.1} parent=1 // pred_check_branch
      %492 = sbr.rel (0) target = $region57
    $region56: #{tpu_custom_call.1} parent=1 // pred_region
      _
    $region57: #{tpu_custom_call.1} parent=1 // pred_fallthru
      _
    // Predicated region
    $region58: #{tpu_custom_call.1} parent=1 // pred_check
      _
    $region59: #{tpu_custom_call.1} parent=1 // pred_check_branch
      %494 = sbr.rel (0) target = $region61
    $region60: #{tpu_custom_call.1} parent=1 // pred_region
      %495 = dma.done [#allocation9], 16
    $region61: #{tpu_custom_call.1} parent=1 // pred_fallthru
      _
    // Predicated region
    $region62: #{tpu_custom_call.1} parent=1 // pred_check
      _
    $region63: #{tpu_custom_call.1} parent=1 // pred_check_branch
      %497 = sbr.rel (0) target = $region65
    $region64: #{tpu_custom_call.1} parent=1 // pred_region
      %498 = dma.done [#allocation9], 16
    $region65: #{tpu_custom_call.1} parent=1 // pred_fallthru
      _
    %499 = vsyncpa [#allocation3], 1
    %500 = vsyncpa [#allocation6], 1
    %501 = vsyncpa [#allocation4], 1
    %502 = vsyncpa [#allocation9], 1

</llo_original>
